<compile_context>
chip_gen: v5e
topology: v5e:2x2
jax: 0.10.0
libtpu: 0.0.40
codegen_flags: <defaults>
</compile_context>

<pallas_src>
import jax
import jax.numpy as jnp
from jax.experimental import pallas as pl
from jax.experimental.pallas import tpu as pltpu


# ---------------------------------------------------------------------------
# Kernels
# ---------------------------------------------------------------------------

def _alias_identity_kernel(x_hbm_ref, o_hbm_ref, flag_ref):
    # Output HBM buffer aliases the input HBM buffer (input_output_aliases={0:0})
    # and forward(x) == x, so there is nothing to move: no DMA, no VMEM staging,
    # no vreg traffic.  A single SMEM scalar store keeps the kernel body
    # non-trivial for the compiler; it touches no HBM data.
    del x_hbm_ref, o_hbm_ref  # intentionally unused: data is already in place
    flag_ref[0] = jnp.int32(1)


def _dma_copy_kernel(x_hbm_ref, o_hbm_ref, copy_sem):
    # Fresh-output path: one HBM->HBM DMA of the whole tensor.  Avoids staging
    # every byte through VMEM/vregs (which would saturate the single vector
    # store slot on v5e and burn double-buffered VMEM on v7x's 64 MiB VMEM).
    cp = pltpu.make_async_copy(x_hbm_ref, o_hbm_ref, copy_sem)
    cp.start()
    cp.wait()


# ---------------------------------------------------------------------------
# Wrapper
# ---------------------------------------------------------------------------

def interpolate_module_forward(x, params=None, interpolate=False, mode="alias"):
    """Forward pass of InterpolateModule (identity).

    `params` (conv1_w, bn1_gamma, bn1_beta, bn1_mean, bn1_var, conv2_w) and
    `interpolate` are accepted for API parity with the nn.Module but are unused
    in forward, exactly like the reference PyTorch implementation.

    mode:
      "none"  - return x directly (no kernel; zero HBM traffic).
      "alias" - Pallas kernel boundary; output aliases the input HBM buffer.
      "copy"  - Pallas kernel producing a distinct output via one HBM->HBM DMA.
    """
    del params, interpolate  # defined in __init__ but dead in forward (`if False:`)

    if mode == "none":
        return x

    nbytes = x.size * x.dtype.itemsize

    if mode == "alias":
        return pl.pallas_call(
            _alias_identity_kernel,
            out_shape=jax.ShapeDtypeStruct(x.shape, x.dtype),
            in_specs=[pl.BlockSpec(memory_space=pl.ANY)],
            out_specs=pl.BlockSpec(memory_space=pl.ANY),
            scratch_shapes=[pltpu.SMEM((1,), jnp.int32)],
            input_output_aliases={0: 0},
            # Identity with aliasing: effectively no bytes accessed inside the
            # kernel; advisory hint for XLA's scheduler.
            cost_estimate=pl.CostEstimate(
                flops=0, transcendentals=0, bytes_accessed=0),
        )(x)

    if mode == "copy":
        return pl.pallas_call(
            _dma_copy_kernel,
            out_shape=jax.ShapeDtypeStruct(x.shape, x.dtype),
            in_specs=[pl.BlockSpec(memory_space=pl.ANY)],
            out_specs=pl.BlockSpec(memory_space=pl.ANY),
            scratch_shapes=[pltpu.SemaphoreType.DMA(())],
            # Pure memory op: read + write of the full tensor.
            cost_estimate=pl.CostEstimate(
                flops=0, transcendentals=0, bytes_accessed=2 * nbytes),
        )(x)

    raise ValueError(f"unknown mode: {mode}")


# ---------------------------------------------------------------------------
# Parameter init (mirrors __init__; unused by forward, as in the reference)
# ---------------------------------------------------------------------------

def init_params(key, in_channels, out_channels):
    """Deterministic initialization mirroring InterpolateModule.__init__."""
    k1, k2 = jax.random.split(key, 2)
    conv1_w = jax.random.normal(
        k1, (out_channels, in_channels, 3, 3), jnp.float32) * 0.05
    bn1_gamma = jnp.ones((out_channels,), jnp.float32)
    bn1_beta = jnp.zeros((out_channels,), jnp.float32)
    bn1_mean = jnp.zeros((out_channels,), jnp.float32)
    bn1_var = jnp.ones((out_channels,), jnp.float32)
    conv2_w = jax.random.normal(
        k2, (in_channels, out_channels, 3, 3), jnp.float32) * 0.05
    # TODO(synk): these parameters exist in __init__ but are never used by the
    # reference forward (only math is behind `if False:`), so the Pallas
    # kernels intentionally do not consume them.
    return (conv1_w, bn1_gamma, bn1_beta, bn1_mean, bn1_var, conv2_w)


# ---------------------------------------------------------------------------
# Demo / correctness check
# ---------------------------------------------------------------------------

if __name__ == "__main__":
    key = jax.random.PRNGKey(0)
    k_x, k_p = jax.random.split(key)

    in_channels, out_channels = 4, 8
    N, H, W = 2, 16, 16

    x = jax.random.normal(k_x, (N, in_channels, H, W), jnp.float32)
    params = init_params(k_p, in_channels, out_channels)

    # Zero-movement kernel boundary (output aliases the input HBM buffer).
    y_alias = jax.block_until_ready(
        interpolate_module_forward(x, params, mode="alias"))
    # Distinct output buffer via a single HBM->HBM DMA (no VMEM/vreg staging).
    y_copy = jax.block_until_ready(
        interpolate_module_forward(x, params, mode="copy"))
    # Pure pass-through (no kernel at all) — semantically identical.
    y_none = interpolate_module_forward(x, params, mode="none")

    for y in (y_alias, y_copy, y_none):
        assert y.shape == x.shape and y.dtype == x.dtype
        assert bool(jnp.all(y == x))

    print("KERNEL_OK")
</pallas_src>

<mosaic_0001>
module attributes {stable_mosaic.version = 11 : i64} {
  func.func @_alias_identity_kernel(%arg0: memref<2x4x16x16xf32, #tpu.memory_space<any>>, %arg1: memref<2x4x16x16xf32, #tpu.memory_space<any>>, %arg2: memref<1xi32, #tpu.memory_space<smem>>) attributes {dimension_semantics = [], scalar_prefetch = 0 : i64, scratch_operands = 1 : i64, tpu.core_type = #tpu.core_type<tc>} {
    %c1_i32 = arith.constant 1 : i32
    %c0 = arith.constant 0 : index
    %0 = memref.load %arg2[%c0] : memref<1xi32, #tpu.memory_space<smem>>
    memref.store %c1_i32, %arg2[%c0] : memref<1xi32, #tpu.memory_space<smem>>
    return
  }
}

</mosaic_0001>

<llo_original>
// kernel: tpu_custom_call.1
$region0: #{tpu_custom_call.1}
  #allocation0 [shape = 'u32[]', space=smem, size = 0x4, offset = 0x4, fixed_abs, tag = 'smem constant byte address 0x4 - core index']
  #allocation1 [shape = 'u32[72,128]{1,0:T(1,128)}', space=vmem, size = 0x9000, scoped, tag = 'internal scratch']
  #allocation2 [shape = 's32[1]{0:T(128)}', space=smem, size = 0x200, scoped, tag = 'scratch operand']
  %s0 = inlined_call_operand.hbm [shape: f32[2,4,16,16], index: 0, kind: input, shape index: {}, may-alias: {0,1}]
  %s1 = inlined_call_operand.hbm [shape: f32[2,4,16,16], index: 1, kind: output, shape index: {}, may-alias: {0,1}]
  %s2 = sld [smem:[#allocation0]]
  $region2: #{tpu_custom_call.1} parent=0
    _
  %s4 = ssub.s32 1, %s2
  %s5 = scalar_select 0, %s4, %s2
  %s6 = scalar_lea.smem [#allocation2], 0
  %7 = sst [smem:[%s6]] 1

</llo_original>
